<compile_context>
chip_gen: v6e
topology: v6e:2x2x1
jax: 0.10.0
libtpu: 0.0.40
codegen_flags: <defaults>
</compile_context>

<pallas_src>
import functools
import math

import jax
import jax.numpy as jnp
from jax.experimental import pallas as pl
from jax.experimental.pallas import tpu as pltpu

_SQRT_2_OVER_PI = math.sqrt(2.0 / math.pi)
_C2 = _SQRT_2_OVER_PI * 0.044715


def _gelu_kernel(x_ref, o_ref, *, compute_dtype):
    x = x_ref[...].astype(compute_dtype)
    c1 = jnp.asarray(_SQRT_2_OVER_PI, dtype=compute_dtype)
    c2 = jnp.asarray(_C2, dtype=compute_dtype)
    half = jnp.asarray(0.5, dtype=compute_dtype)
    inner = x * (c1 + c2 * (x * x))          # == sqrt(2/pi) * (x + 0.044715*x^3)
    y = x * (half + half * jnp.tanh(inner))  # == 0.5*x*(1 + tanh(inner))
    o_ref[...] = y.astype(o_ref.dtype)


def _tpu_generation():
    """Best-effort TPU generation detection (5 = v5e, 6 = v6e-class, 7 = v7x)."""
    try:
        kind = jax.devices()[0].device_kind.lower()
    except Exception:
        return 6
    if "v7" in kind:
        return 7
    if "v6" in kind:
        return 6
    if "v5e" in kind or "v5 lite" in kind or "v5lite" in kind:
        return 5
    return 6


def gelu(x, *, target_block_bytes=None):
    """GPT-2 tanh-approximation GELU applied elementwise via a Pallas TPU kernel."""
    orig_shape = x.shape
    total = x.size
    if total == 0:
        return x
    dtype = x.dtype
    itemsize = jnp.dtype(dtype).itemsize
    gen = _tpu_generation()

    if target_block_bytes is None:
        target_block_bytes = {5: 3, 6: 6, 7: 8}.get(gen, 4) * 1024 * 1024

    # --- Lane-dense 2D layout (last dim a multiple of 128, bounded <= 1024) ---
    lane_width = None
    for cand in (1024, 896, 768, 640, 512, 384, 256, 128):
        if total % cand == 0:
            lane_width = cand
            break

    padded = False
    if lane_width is not None:
        x2d = x.reshape(-1, lane_width)
    else:
        # One-time pad to a lane-dense slab instead of masked partial stores.
        lane_width = 512 if total >= 512 else 128
        padded_total = -(-total // lane_width) * lane_width
        pad = padded_total - total
        xf = x.reshape(-1)
        if pad:
            xf = jnp.pad(xf, (0, pad))
            padded = True
        x2d = xf.reshape(-1, lane_width)

    rows, cols = x2d.shape

    # --- Row tiling by byte budget (multiple of 8 rows) -----------------------
    bytes_per_row = cols * itemsize
    tile_rows = max(1, target_block_bytes // bytes_per_row)
    tile_rows = max(8, (tile_rows // 8) * 8)
    if tile_rows >= rows:
        tile_rows = rows
        # v7x has 2 TensorCores: split a non-trivial single block so the
        # "parallel" grid axis can shard across both cores.
        if gen >= 7 and rows >= 16 and rows * bytes_per_row >= (1 << 20):
            half_rows = -(-rows // 2)
            tile_rows = max(8, ((half_rows + 7) // 8) * 8)

    grid = (pl.cdiv(rows, tile_rows),)
    block_bytes = tile_rows * cols * itemsize

    # 2 arrays (in + out) x 2 buffers x block_bytes, plus headroom; stay well
    # under physical VMEM (64 MiB/TC on v7x, 128 MiB otherwise).
    vmem_cap = (48 << 20) if gen >= 7 else (96 << 20)
    vmem_limit = int(min(vmem_cap, max(32 << 20, 4 * block_bytes + (8 << 20))))

    # bf16-native math on v6e/v7x (bf16 VPU/EUP); f32 internal otherwise.
    compute_dtype = dtype if (dtype == jnp.bfloat16 and gen >= 6) else jnp.float32

    cost = pl.CostEstimate(
        flops=8 * total,
        transcendentals=total,
        bytes_accessed=2 * total * itemsize,
    )

    out = pl.pallas_call(
        functools.partial(_gelu_kernel, compute_dtype=compute_dtype),
        out_shape=jax.ShapeDtypeStruct((rows, cols), dtype),
        grid_spec=pltpu.PrefetchScalarGridSpec(
            num_scalar_prefetch=0,
            grid=grid,
            in_specs=[pl.BlockSpec((tile_rows, cols), lambda i: (i, 0))],
            out_specs=pl.BlockSpec((tile_rows, cols), lambda i: (i, 0)),
        ),
        compiler_params=pltpu.CompilerParams(
            dimension_semantics=("parallel",),
            vmem_limit_bytes=vmem_limit,
        ),
        cost_estimate=cost,
    )(x2d)

    if padded:
        out = out.reshape(-1)[:total]
    return out.reshape(orig_shape)


if __name__ == "__main__":
    def ref_gelu(x):
        xf = x.astype(jnp.float32)
        return (0.5 * xf * (1.0 + jnp.tanh(jnp.sqrt(2.0 / jnp.pi)
                                           * (xf + 0.044715 * xf ** 3)))).astype(x.dtype)

    key = jax.random.PRNGKey(0)

    # Small GPT-2-like activation: (batch=2, seq=8, hidden=32).
    x = jax.random.normal(key, (2, 8, 32), dtype=jnp.float32)
    y = gelu(x)
    jax.block_until_ready(y)
    assert y.shape == x.shape and y.dtype == x.dtype
    assert jnp.max(jnp.abs(y - ref_gelu(x))) < 1e-5

    # Larger multi-block lane-dense f32 path.
    x2 = jax.random.normal(jax.random.PRNGKey(1), (4, 128, 768), dtype=jnp.float32)
    y2 = gelu(x2)
    jax.block_until_ready(y2)
    assert jnp.max(jnp.abs(y2 - ref_gelu(x2))) < 1e-5

    # bf16 path (native bf16 compute on v6e/v7x, f32 internal on v5e).
    x3 = jax.random.normal(jax.random.PRNGKey(2), (2, 64, 256), dtype=jnp.bfloat16)
    y3 = gelu(x3)
    jax.block_until_ready(y3)
    err3 = jnp.max(jnp.abs(y3.astype(jnp.float32) - ref_gelu(x3).astype(jnp.float32)))
    assert err3 < 1e-1

    # Awkward shape -> one-time pad + lane-dense tiles (no masked stores).
    x4 = jax.random.normal(jax.random.PRNGKey(3), (3, 5, 7), dtype=jnp.float32)
    y4 = gelu(x4)
    jax.block_until_ready(y4)
    assert y4.shape == x4.shape and y4.dtype == x4.dtype
    assert jnp.max(jnp.abs(y4 - ref_gelu(x4))) < 1e-5

    print("KERNEL_OK")
</pallas_src>

<mosaic_0001>
module attributes {stable_mosaic.version = 11 : i64} {
  func.func @_gelu_kernel(%arg0: i32, %arg1: memref<1x512xf32, #tpu.memory_space<vmem>>, %arg2: memref<1x512xf32, #tpu.memory_space<vmem>>) attributes {dimension_semantics = [#tpu.dimension_semantics<parallel>], iteration_bounds = array<i64: 1>, scalar_prefetch = 0 : i64, scratch_operands = 0 : i64, tpu.core_type = #tpu.core_type<tc>, window_params = [{transform_indices = @transform_0, window_bounds = array<i64: 1, 512>}, {transform_indices = @transform_1, window_bounds = array<i64: 1, 512>}]} {
    %c0 = arith.constant 0 : index
    %c0_0 = arith.constant 0 : index
    %0 = vector.load %arg1[%c0, %c0_0] : memref<1x512xf32, #tpu.memory_space<vmem>>, vector<1x512xf32>
    %1 = arith.mulf %0, %0 : vector<1x512xf32>
    %cst = arith.constant 0.0356774069 : f32
    %2 = vector.broadcast %cst : f32 to vector<1x512xf32>
    %3 = arith.mulf %2, %1 : vector<1x512xf32>
    %cst_1 = arith.constant 0.797884583 : f32
    %4 = vector.broadcast %cst_1 : f32 to vector<1x512xf32>
    %5 = arith.addf %4, %3 : vector<1x512xf32>
    %6 = arith.mulf %0, %5 : vector<1x512xf32>
    %7 = math.tanh %6 : vector<1x512xf32>
    %cst_2 = arith.constant 5.000000e-01 : f32
    %8 = vector.broadcast %cst_2 : f32 to vector<1x512xf32>
    %9 = arith.mulf %8, %7 : vector<1x512xf32>
    %cst_3 = arith.constant 5.000000e-01 : f32
    %10 = vector.broadcast %cst_3 : f32 to vector<1x512xf32>
    %11 = arith.addf %10, %9 : vector<1x512xf32>
    %12 = arith.mulf %0, %11 : vector<1x512xf32>
    %c0_4 = arith.constant 0 : index
    %c0_5 = arith.constant 0 : index
    %13 = vector.load %arg2[%c0_4, %c0_5] : memref<1x512xf32, #tpu.memory_space<vmem>>, vector<1x512xf32>
    tpu.vector_store %arg2[%c0_4, %c0_5], %12 {strides = array<i32>} : memref<1x512xf32, #tpu.memory_space<vmem>>, vector<1x512xf32>,
    return
  }
  func.func @transform_0(%arg0: i32) -> (i32, i32) {
    %c0_i32 = arith.constant 0 : i32
    %c0_i32_0 = arith.constant 0 : i32
    return %arg0, %c0_i32 : i32, i32
  }
  func.func @transform_1(%arg0: i32) -> (i32, i32) {
    %c0_i32 = arith.constant 0 : i32
    %c0_i32_0 = arith.constant 0 : i32
    return %arg0, %c0_i32 : i32, i32
  }
}

</mosaic_0001>

<llo_original>
// kernel: tpu_custom_call.1
$region0: #{tpu_custom_call.1}
  #allocation0 [shape = 'u32[]', space=smem, size = 0x4, offset = 0x4, fixed_abs, tag = 'smem constant byte address 0x4 - core index']
  #allocation1 [shape = 'u32[144,128]{1,0:T(1,128)}', space=vmem, size = 0x12000, scoped, tag = 'internal scratch']
  %s0 = inlined_call_operand.hbm [shape: f32[1,512], index: 0, kind: input, shape index: {}]
  %s1 = inlined_call_operand.hbm [shape: f32[1,512], index: 1, kind: output, shape index: {}]
  %s2 = sld [smem:[#allocation0]]
  $region18: #{tpu_custom_call.1} parent=0
    _
  %s4 = ssub.s32 1, %s2
  %s5 = scalar_select 0, %s4, %s2
  $region1: #{tpu_custom_call.1} parent=0
    #allocation2 [shape = 'u8[2048]{0}', space=vmem, size = 0x800, scoped, tag = 'input window, operand 0, single buffered']
    #allocation3 [shape = 's32[1]{0}', space=sflag, size = 0x4, scoped, tag = 'scoped memory for tpu_custom_call.1']
    #allocation4 [shape = 's32[1]{0}', space=sflag, size = 0x4, scoped, tag = 'scoped memory for tpu_custom_call.1']
    #allocation5 [shape = 'u8[2048]{0}', space=vmem, size = 0x800, scoped, tag = 'output window, operand 0, single buffered']
    %6 = vsyncpa [#allocation3], 0
    %7 = vsyncpa [#allocation4], 0
    // Predicated region
    $region2: #{tpu_custom_call.1} parent=1 // pred_check
      _
    $region3: #{tpu_custom_call.1} parent=1 // pred_check_branch
      %9 = sbr.rel (0) target = $region5
    $region4: #{tpu_custom_call.1} parent=1 // pred_region
      %s11 = ssub.s32 64, 64
      %12 = vsyncadd [#allocation3], %s11
      %s14 = sshll.u32 [#allocation2], 4
      %s15 = int_to_ptr.vmem [resolvable:$true] %s14
      %17 = dma.hbm_to_vmem [thread:$0]  %s0, 64, %s15, [#allocation3]
    $region5: #{tpu_custom_call.1} parent=1 // pred_fallthru
      _
    // Predicated region
    $region6: #{tpu_custom_call.1} parent=1 // pred_check
      _
    $region7: #{tpu_custom_call.1} parent=1 // pred_check_branch
      %19 = sbr.rel (0) target = $region9
    $region8: #{tpu_custom_call.1} parent=1 // pred_region
      %20 = dma.done [#allocation3], 64
    $region9: #{tpu_custom_call.1} parent=1 // pred_fallthru
      _
    %v21 = vld [vmem:[#allocation2] sm:$0xf]
    %v22 = vmul.f32 %v21, %v21
    %v23 = vmul.f32 %v22, 0.035677407
    %v24 = vadd.f32 %v23, 0.7978846
    %v25 = vmul.f32 %v21, %v24
    %v26 = vtanh.pop %v25
    %v27 = vmul.f32 %v26, 0.5
    %v28 = vadd.f32 %v27, 0.5
    %v29 = vmul.f32 %v21, %v28
    %v30 = vlaneseq
    %vm31 = vcmp.ge.s32.totalorder %v30, 0
    %vm32 = vcmp.lt.s32.totalorder %v30, 512
    %vm33 = vmand %vm31, %vm32
    %34 = vst.msk [vmem:[#allocation5] sm:$0xf] %vm33, %v29
    // Predicated region
    $region10: #{tpu_custom_call.1} parent=1 // pred_check
      _
    $region11: #{tpu_custom_call.1} parent=1 // pred_check_branch
      %36 = sbr.rel (0) target = $region13
    $region12: #{tpu_custom_call.1} parent=1 // pred_region
      %s38 = ssub.s32 64, 64
      %39 = vsyncadd [#allocation4], %s38
      %s41 = sshll.u32 [#allocation5], 4
      %s42 = int_to_ptr.vmem [resolvable:$true] %s41
      %44 = dma.vmem_to_hbm [thread:$0]  %s42, 64, %s1, [#allocation4]
    $region13: #{tpu_custom_call.1} parent=1 // pred_fallthru
      _
    // Predicated region
    $region14: #{tpu_custom_call.1} parent=1 // pred_check
      _
    $region15: #{tpu_custom_call.1} parent=1 // pred_check_branch
      %46 = sbr.rel (0) target = $region17
    $region16: #{tpu_custom_call.1} parent=1 // pred_region
      %47 = dma.done [#allocation4], 64
    $region17: #{tpu_custom_call.1} parent=1 // pred_fallthru
      _
    %48 = vsyncpa [#allocation3], 1
    %49 = vsyncpa [#allocation4], 1

</llo_original>
